<compile_context>
chip_gen: v7x
topology: tpu7x:2x2x1
jax: 0.10.0
libtpu: 0.0.40
codegen_flags: <defaults>
</compile_context>

<pallas_src>
import functools

import jax
import jax.numpy as jnp
from jax.experimental import pallas as pl
from jax.experimental.pallas import tpu as pltpu


def _round_up(n, m):
    return ((n + m - 1) // m) * m


# ---------------------------------------------------------------------------
# Pallas kernel: pairwise currents term   sum_ij K(cx_i, cy_j) * <nx_i, ny_j>
#
#   a_ref : (tm, 8)        packed x-side rows   [-2*cx, |cx|^2, 1, nx]
#   b_ref : (1, 8, 2*tn)   packed y-side tile   [[cy; 1; |cy|^2; 0] | [0; 0; ny]]
#   o_ref : (tm, 128)      per-i lane-dense partial sums (resident across the j axis)
# ---------------------------------------------------------------------------
def _currents_pair_kernel(a_ref, b_ref, o_ref, *, inv_sigma2, tn, symmetric):
    i = pl.program_id(0)
    j = pl.program_id(1)

    @pl.when(j == 0)
    def _init():
        o_ref[...] = jnp.zeros_like(o_ref)

    def _tile_partial():
        a = a_ref[...]                                          # (tm, 8)
        b = b_ref[0]                                            # (8, 2*tn)
        # one K=8 MXU matmul: left half -> squared distances, right half -> <nx, ny>
        p = jnp.dot(a, b, preferred_element_type=jnp.float32)   # (tm, 2*tn)
        d2 = p[:, :tn]
        dotn = p[:, tn:]
        denom = 1.0 + d2 * inv_sigma2
        # EUP approx reciprocal + one Newton step (keeps ~f32 accuracy, off the VPU divide path)
        r = pl.reciprocal(denom, approx=True)
        r = r * (2.0 - denom * r)
        kd = (r * r) * dotn                                     # (tm, tn)
        # fold lane groups -> lane-dense (tm, 128) partial (pure VPU adds, no XLU reduce)
        part = kd[:, 0:128]
        for g in range(1, tn // 128):
            part = part + kd[:, g * 128:(g + 1) * 128]
        return part

    if symmetric:
        # x == y with identical tiling on both axes: only upper-triangular tiles are
        # computed; off-diagonal tiles count twice. (DMAs of skipped tiles still run but
        # are tiny; the elementwise chain is what dominates at these tile sizes.)
        @pl.when(j >= i)
        def _acc():
            w = jnp.where(j == i, jnp.float32(1.0), jnp.float32(2.0))
            o_ref[...] += w * _tile_partial()
    else:
        o_ref[...] += _tile_partial()


# ---------------------------------------------------------------------------
# Wrapper: packing + pallas_call
# ---------------------------------------------------------------------------
def _pack_x(c, n, rows_padded):
    """A = [-2*c, |c|^2, 1, n]  padded with zero rows (zero rows contribute exactly 0)."""
    c = c.astype(jnp.float32)
    n = n.astype(jnp.float32)
    c2 = jnp.sum(c * c, axis=-1, keepdims=True)
    ones = jnp.ones_like(c2)
    a = jnp.concatenate([-2.0 * c, c2, ones, n], axis=-1)       # (N, 8)
    return jnp.pad(a, ((0, rows_padded - a.shape[0]), (0, 0)))


def _pack_y(c, n, cols_padded, tn):
    """Block-diagonal packed y side, shape (cols_padded // tn, 8, 2*tn)."""
    c = c.astype(jnp.float32)
    n = n.astype(jnp.float32)
    m = c.shape[0]
    pad = ((0, cols_padded - m), (0, 0))
    cT = jnp.pad(c, pad).T                                      # (3, Mp)
    nT = jnp.pad(n, pad).T                                      # (3, Mp)
    c2 = jnp.pad(jnp.sum(c * c, axis=-1), (0, cols_padded - m))[None, :]   # (1, Mp)
    ones = jnp.ones((1, cols_padded), jnp.float32)
    zeros3 = jnp.zeros((3, cols_padded), jnp.float32)
    zeros5 = jnp.zeros((5, cols_padded), jnp.float32)
    bd = jnp.concatenate([cT, ones, c2, zeros3], axis=0)        # (8, Mp): distance part
    bn = jnp.concatenate([zeros5, nT], axis=0)                  # (8, Mp): normal-dot part
    nb = cols_padded // tn
    bd = bd.reshape(8, nb, tn).transpose(1, 0, 2)               # (nb, 8, tn)
    bn = bn.reshape(8, nb, tn).transpose(1, 0, 2)               # (nb, 8, tn)
    return jnp.concatenate([bd, bn], axis=2)                    # (nb, 8, 2*tn)


def currents_pair_energy(cx, nx, cy, ny, sigma, *, symmetric=False, max_tile=512):
    """sum_ij K(cx_i, cy_j) * <nx_i, ny_j> with the 'cauchy' kernel (Pallas TPU)."""
    n = cx.shape[0]
    m = cy.shape[0]
    if symmetric:
        assert n == m, "symmetric term requires identical x/y sides"
        # identical tiling on both axes so tile (i, j) mirrors tile (j, i)
        tm = tn = min(max_tile, _round_up(max(n, 128), 128))
    else:
        tm = min(max_tile, _round_up(max(n, 8), 8))
        tn = min(max_tile, _round_up(max(m, 128), 128))
    n_p = _round_up(n, tm)
    m_p = _round_up(m, tn)

    a = _pack_x(cx, nx, n_p)                                    # (n_p, 8)
    b = _pack_y(cy, ny, m_p, tn)                                # (m_p // tn, 8, 2*tn)

    grid = (n_p // tm, m_p // tn)
    kernel = functools.partial(_currents_pair_kernel,
                               inv_sigma2=float(1.0 / (sigma * sigma)),
                               tn=tn, symmetric=symmetric)

    out = pl.pallas_call(
        kernel,
        out_shape=jax.ShapeDtypeStruct((n_p, 128), jnp.float32),
        grid_spec=pltpu.PrefetchScalarGridSpec(
            num_scalar_prefetch=0,
            grid=grid,
            in_specs=[pl.BlockSpec((tm, 8), lambda i, j: (i, 0)),
                      pl.BlockSpec((1, 8, 2 * tn), lambda i, j: (j, 0, 0))],
            out_specs=pl.BlockSpec((tm, 128), lambda i, j: (i, 0))),
        compiler_params=pltpu.CompilerParams(
            dimension_semantics=("parallel", "arbitrary"),
            vmem_limit_bytes=40 * 1024 * 1024),
    )(a, b)
    # padded rows / columns contribute exactly zero; tiny final reduction in plain JAX
    return jnp.sum(out)


# ---------------------------------------------------------------------------
# Module port
# ---------------------------------------------------------------------------
class DeformableCurrentsPallas:
    """JAX/Pallas port of camp DeformableCurrents (forward pass, 'cauchy' kernel)."""

    def __init__(self, src_vertices, src_indices, tar_normals, tar_centers,
                 sigma, kernel="cauchy"):
        assert kernel == "cauchy"
        self.src_vertices = jnp.asarray(src_vertices, jnp.float32)
        self.src_indices = jnp.asarray(src_indices, jnp.int32)
        self.tar_normals = jnp.asarray(tar_normals, jnp.float32)
        self.tar_centers = jnp.asarray(tar_centers, jnp.float32)
        self.sigma = float(sigma)
        # target-target energy is constant -> precomputed once (as in CurrentsEnergy.__init__);
        # it is a self term, so the symmetric (triangular-tile) schedule halves its cost.
        self.e3 = currents_pair_energy(self.tar_centers, self.tar_normals,
                                       self.tar_centers, self.tar_normals,
                                       self.sigma, symmetric=True)

    def forward(self):
        # Triangle gather + normals/centers are linear-cost glue; a Pallas kernel here would
        # be lane-sparse in (F,3) layout, so it is left to XLA fusion per the perf review.
        tris = self.src_vertices[self.src_indices]              # (F, 3, 3)
        a, b, c = tris[:, 0, :], tris[:, 1, :], tris[:, 2, :]
        normals = 0.5 * jnp.cross(a - b, c - b)
        centers = tris.sum(1) / 3.0

        e1 = currents_pair_energy(centers, normals, centers, normals,
                                  self.sigma, symmetric=True)
        e2 = currents_pair_energy(centers, normals,
                                  self.tar_centers, self.tar_normals, self.sigma)
        return e1 - 2.0 * e2 + self.e3


# ---------------------------------------------------------------------------
# Pure-JAX reference for verification
# ---------------------------------------------------------------------------
def _reference_term(cx, nx, cy, ny, sigma):
    d2 = jnp.sum((cx[:, None, :] - cy[None, :, :]) ** 2, axis=-1)
    k = 1.0 / (1.0 + d2 / sigma ** 2) ** 2
    return jnp.sum(k * (nx @ ny.T))


def _reference_energy(src_vertices, src_indices, tar_normals, tar_centers, sigma):
    tris = src_vertices[src_indices]
    a, b, c = tris[:, 0, :], tris[:, 1, :], tris[:, 2, :]
    normals = 0.5 * jnp.cross(a - b, c - b)
    centers = tris.sum(1) / 3.0
    return (_reference_term(centers, normals, centers, normals, sigma)
            - 2.0 * _reference_term(centers, normals, tar_centers, tar_normals, sigma)
            + _reference_term(tar_centers, tar_normals, tar_centers, tar_normals, sigma))


def _make_surface(key, n_vertices, n_faces):
    kv, ki = jax.random.split(key)
    vertices = jax.random.normal(kv, (n_vertices, 3), dtype=jnp.float32)
    indices = jax.random.randint(ki, (n_faces, 3), 0, n_vertices, dtype=jnp.int32)
    return vertices, indices


def _normals_centers(vertices, indices):
    t = vertices[indices]
    normals = 0.5 * jnp.cross(t[:, 0] - t[:, 1], t[:, 2] - t[:, 1])
    centers = t.sum(1) / 3.0
    return normals, centers


if __name__ == "__main__":
    key = jax.random.PRNGKey(0)
    k_src, k_tar, k_big1, k_big2 = jax.random.split(key, 4)
    sigma = 0.5

    # --- module-level test at small shapes (24 source faces, 20 target faces) ---
    src_vertices, src_indices = _make_surface(k_src, 20, 24)
    tar_vertices, tar_indices = _make_surface(k_tar, 18, 20)
    tar_normals, tar_centers = _normals_centers(tar_vertices, tar_indices)

    model = DeformableCurrentsPallas(src_vertices, src_indices,
                                     tar_normals, tar_centers, sigma)
    energy = jax.block_until_ready(model.forward())
    ref = jax.block_until_ready(
        _reference_energy(src_vertices, src_indices, tar_normals, tar_centers, sigma))
    assert jnp.allclose(energy, ref, rtol=1e-3, atol=1e-3), (energy, ref)

    # --- multi-tile check (grid > 1 on both axes; exercises the symmetric j>=i schedule) ---
    v1, i1 = _make_surface(k_big1, 100, 300)
    v2, i2 = _make_surface(k_big2, 90, 260)
    n1, c1 = _normals_centers(v1, i1)
    n2, c2 = _normals_centers(v2, i2)
    e_sym = currents_pair_energy(c1, n1, c1, n1, sigma, symmetric=True, max_tile=128)
    e_cross = currents_pair_energy(c1, n1, c2, n2, sigma, max_tile=128)
    e_sym, e_cross = jax.block_until_ready((e_sym, e_cross))
    e_sym_ref = _reference_term(c1, n1, c1, n1, sigma)
    e_cross_ref = _reference_term(c1, n1, c2, n2, sigma)
    assert jnp.allclose(e_sym, e_sym_ref, rtol=1e-3, atol=1e-3), (e_sym, e_sym_ref)
    assert jnp.allclose(e_cross, e_cross_ref, rtol=1e-3, atol=1e-3), (e_cross, e_cross_ref)

    print("KERNEL_OK")
</pallas_src>

<mosaic_0001>
module attributes {stable_mosaic.version = 11 : i64} {
  func.func @_currents_pair_kernel(%arg0: i32, %arg1: i32, %arg2: memref<128x8xf32, #tpu.memory_space<vmem>>, %arg3: memref<1x8x256xf32, #tpu.memory_space<vmem>>, %arg4: memref<128x128xf32, #tpu.memory_space<vmem>>) attributes {dimension_semantics = [#tpu.dimension_semantics<parallel>, #tpu.dimension_semantics<arbitrary>], iteration_bounds = array<i64: 1, 1>, scalar_prefetch = 0 : i64, scratch_operands = 0 : i64, tpu.core_type = #tpu.core_type<tc>, window_params = [{transform_indices = @transform_0, window_bounds = array<i64: 128, 8>}, {transform_indices = @transform_1, window_bounds = array<i64: 1, 8, 256>}, {transform_indices = @transform_2, window_bounds = array<i64: 128, 128>}]} {
    %c0_i32 = arith.constant 0 : i32
    %0 = arith.cmpi eq, %arg1, %c0_i32 : i32
    %1 = arith.extui %0 : i1 to i32
    %c0_i32_0 = arith.constant 0 : i32
    %2 = arith.cmpi ne, %1, %c0_i32_0 : i32
    scf.if %2 {
      %cst = arith.constant 0.000000e+00 : f32
      %6 = vector.broadcast %cst : f32 to vector<128x128xf32>
      %c0 = arith.constant 0 : index
      %c0_2 = arith.constant 0 : index
      %7 = vector.load %arg4[%c0, %c0_2] : memref<128x128xf32, #tpu.memory_space<vmem>>, vector<128x128xf32>
      tpu.vector_store %arg4[%c0, %c0_2], %6 {strides = array<i32>} : memref<128x128xf32, #tpu.memory_space<vmem>>, vector<128x128xf32>,
    } else {
    }
    %3 = arith.cmpi sge, %arg1, %arg0 : i32
    %4 = arith.extui %3 : i1 to i32
    %c0_i32_1 = arith.constant 0 : i32
    %5 = arith.cmpi ne, %4, %c0_i32_1 : i32
    scf.if %5 {
      %6 = arith.cmpi eq, %arg1, %arg0 : i32
      %cst = arith.constant 1.000000e+00 : f32
      %cst_2 = arith.constant 2.000000e+00 : f32
      %7 = arith.select %6, %cst, %cst_2 : f32
      %c0 = arith.constant 0 : index
      %c0_3 = arith.constant 0 : index
      %8 = vector.load %arg4[%c0, %c0_3] : memref<128x128xf32, #tpu.memory_space<vmem>>, vector<128x128xf32>
      %c0_4 = arith.constant 0 : index
      %c0_5 = arith.constant 0 : index
      %9 = vector.load %arg2[%c0_4, %c0_5] : memref<128x8xf32, #tpu.memory_space<vmem>>, vector<128x8xf32>
      %c0_6 = arith.constant 0 : index
      %c0_7 = arith.constant 0 : index
      %c0_8 = arith.constant 0 : index
      %10 = vector.load %arg3[%c0_6, %c0_7, %c0_8] : memref<1x8x256xf32, #tpu.memory_space<vmem>>, vector<1x8x256xf32>
      %11 = vector.shape_cast %10 : vector<1x8x256xf32> to vector<8x256xf32>
      %cst_9 = arith.constant dense<0.000000e+00> : vector<128x256xf32>
      %12 = tpu.matmul %9, %11, %cst_9 {dimension_numbers = #tpu.dot_dimension_numbers<[1], [0], [0], [1], [0, 0, 1, 1], [], []>} : vector<128x8xf32>, vector<8x256xf32>, vector<128x256xf32> -> vector<128x256xf32>
      %13 = vector.extract_strided_slice %12 {offsets = [0, 0], sizes = [128, 128], strides = [1, 1]} : vector<128x256xf32> to vector<128x128xf32>
      %14 = vector.extract_strided_slice %12 {offsets = [0, 128], sizes = [128, 128], strides = [1, 1]} : vector<128x256xf32> to vector<128x128xf32>
      %cst_10 = arith.constant 4.000000e+00 : f32
      %15 = vector.broadcast %cst_10 : f32 to vector<128x128xf32>
      %16 = arith.mulf %13, %15 : vector<128x128xf32>
      %cst_11 = arith.constant 1.000000e+00 : f32
      %17 = vector.broadcast %cst_11 : f32 to vector<128x128xf32>
      %18 = arith.addf %17, %16 : vector<128x128xf32>
      %19 = tpu.reciprocal %18 {approx = true} : vector<128x128xf32> -> vector<128x128xf32>
      %20 = arith.mulf %18, %19 : vector<128x128xf32>
      %cst_12 = arith.constant 2.000000e+00 : f32
      %21 = vector.broadcast %cst_12 : f32 to vector<128x128xf32>
      %22 = arith.subf %21, %20 : vector<128x128xf32>
      %23 = arith.mulf %19, %22 : vector<128x128xf32>
      %24 = arith.mulf %23, %23 : vector<128x128xf32>
      %25 = arith.mulf %24, %14 : vector<128x128xf32>
      %26 = vector.broadcast %7 : f32 to vector<128x128xf32>
      %27 = arith.mulf %26, %25 : vector<128x128xf32>
      %28 = arith.addf %8, %27 : vector<128x128xf32>
      %c0_13 = arith.constant 0 : index
      %c0_14 = arith.constant 0 : index
      %29 = vector.load %arg4[%c0_13, %c0_14] : memref<128x128xf32, #tpu.memory_space<vmem>>, vector<128x128xf32>
      tpu.vector_store %arg4[%c0_13, %c0_14], %28 {strides = array<i32>} : memref<128x128xf32, #tpu.memory_space<vmem>>, vector<128x128xf32>,
    } else {
    }
    return
  }
  func.func @transform_0(%arg0: i32, %arg1: i32) -> (i32, i32) {
    %c0_i32 = arith.constant 0 : i32
    %c0_i32_0 = arith.constant 0 : i32
    return %arg0, %c0_i32 : i32, i32
  }
  func.func @transform_1(%arg0: i32, %arg1: i32) -> (i32, i32, i32) {
    %c0_i32 = arith.constant 0 : i32
    %c0_i32_0 = arith.constant 0 : i32
    %c0_i32_1 = arith.constant 0 : i32
    return %arg1, %c0_i32, %c0_i32_0 : i32, i32, i32
  }
  func.func @transform_2(%arg0: i32, %arg1: i32) -> (i32, i32) {
    %c0_i32 = arith.constant 0 : i32
    %c0_i32_0 = arith.constant 0 : i32
    return %arg0, %c0_i32 : i32, i32
  }
}

</mosaic_0001>

<llo_original>
// kernel: tpu_custom_call.1
$region0: #{tpu_custom_call.1}
  #allocation0 [shape = 'u32[]', space=smem, size = 0x4, offset = 0x4, fixed_abs, tag = 'smem constant byte address 0x4 - core index']
  #allocation1 [shape = 'u32[144,128]{1,0:T(1,128)}', space=vmem, size = 0x12000, scoped, tag = 'internal scratch']
  %s0 = inlined_call_operand.vmem [shape: f32[128,8], index: 0, kind: input, shape index: {}]
  %s1 = inlined_call_operand.vmem [shape: f32[1,8,256], index: 1, kind: input, shape index: {}]
  %s2 = inlined_call_operand.hbm [shape: f32[128,128], index: 2, kind: output, shape index: {}]
  %s3 = sld [smem:[#allocation0]]
  $region26: #{tpu_custom_call.1} parent=0
    _
  %s5 = ssub.s32 1, %s3
  %s6 = scalar_select 0, %s5, %s3
  $region1: #{tpu_custom_call.1} parent=0
    #allocation2 [shape = 'u8[65536]{0}', space=vmem, size = 0x10000, scoped, tag = 'output window, operand 0, single buffered']
    #allocation3 [shape = 's32[1]{0}', space=sflag, size = 0x4, scoped, tag = 'scoped memory for tpu_custom_call.1']
    %7 = vsyncpa [#allocation3], 0
    // Predicated region
    $region2: #{tpu_custom_call.1} parent=1 // pred_check
      _
    $region3: #{tpu_custom_call.1} parent=1 // pred_check_branch
      %9 = sbr.rel (0) target = $region5
    $region4: #{tpu_custom_call.1} parent=1 // pred_region
      _
    $region5: #{tpu_custom_call.1} parent=1 // pred_fallthru
      _
    // Predicated region
    $region6: #{tpu_custom_call.1} parent=1 // pred_check
      _
    $region7: #{tpu_custom_call.1} parent=1 // pred_check_branch
      %11 = sbr.rel (0) target = $region9
    $region8: #{tpu_custom_call.1} parent=1 // pred_region
      _
    $region9: #{tpu_custom_call.1} parent=1 // pred_fallthru
      _
    %p12 = scmp.eq.s32.totalorder 0, 0
    // Predicated region
    $region10: #{tpu_custom_call.1} parent=1 // pred_check
      %p13 = pneg %p12
    $region11: #{tpu_custom_call.1} parent=1 // pred_check_branch
      %15 = sbr.rel (%p13) target = $region13
    $region12: #{tpu_custom_call.1} parent=1 // pred_region
      %16 = vst [vmem:[#allocation2] sm:$0xff] 0.0
      %17 = vst [vmem:[#allocation2 + $0x8] sm:$0xff] 0.0
      %18 = vst [vmem:[#allocation2 + $0x10] sm:$0xff] 0.0
      %19 = vst [vmem:[#allocation2 + $0x18] sm:$0xff] 0.0
      %20 = vst [vmem:[#allocation2 + $0x20] sm:$0xff] 0.0
      %21 = vst [vmem:[#allocation2 + $0x28] sm:$0xff] 0.0
      %22 = vst [vmem:[#allocation2 + $0x30] sm:$0xff] 0.0
      %23 = vst [vmem:[#allocation2 + $0x38] sm:$0xff] 0.0
      %24 = vst [vmem:[#allocation2 + $0x40] sm:$0xff] 0.0
      %25 = vst [vmem:[#allocation2 + $0x48] sm:$0xff] 0.0
      %26 = vst [vmem:[#allocation2 + $0x50] sm:$0xff] 0.0
      %27 = vst [vmem:[#allocation2 + $0x58] sm:$0xff] 0.0
      %28 = vst [vmem:[#allocation2 + $0x60] sm:$0xff] 0.0
      %29 = vst [vmem:[#allocation2 + $0x68] sm:$0xff] 0.0
      %30 = vst [vmem:[#allocation2 + $0x70] sm:$0xff] 0.0
      %31 = vst [vmem:[#allocation2 + $0x78] sm:$0xff] 0.0
    $region13: #{tpu_custom_call.1} parent=1 // pred_fallthru
      _
    %p32 = scmp.ge.s32.totalorder 0, 0
    // Predicated region
    $region14: #{tpu_custom_call.1} parent=1 // pred_check
      %p33 = pneg %p32
    $region15: #{tpu_custom_call.1} parent=1 // pred_check_branch
      %35 = sbr.rel (%p33) target = $region17
    $region16: #{tpu_custom_call.1} parent=1 // pred_region
      %p36 = scmp.eq.s32.totalorder 0, 0
      %s37 = scalar_select %p36, 1.0, 2.0
      %v38 = vld [vmem:[#allocation2] sm:$0xff]
      %v39 = vld [vmem:[#allocation2 + $0x8] sm:$0xff]
      %v40 = vld [vmem:[#allocation2 + $0x10] sm:$0xff]
      %v41 = vld [vmem:[#allocation2 + $0x18] sm:$0xff]
      %v42 = vld [vmem:[#allocation2 + $0x20] sm:$0xff]
      %v43 = vld [vmem:[#allocation2 + $0x28] sm:$0xff]
      %v44 = vld [vmem:[#allocation2 + $0x30] sm:$0xff]
      %v45 = vld [vmem:[#allocation2 + $0x38] sm:$0xff]
      %v46 = vld [vmem:[#allocation2 + $0x40] sm:$0xff]
      %v47 = vld [vmem:[#allocation2 + $0x48] sm:$0xff]
      %v48 = vld [vmem:[#allocation2 + $0x50] sm:$0xff]
      %v49 = vld [vmem:[#allocation2 + $0x58] sm:$0xff]
      %v50 = vld [vmem:[#allocation2 + $0x60] sm:$0xff]
      %v51 = vld [vmem:[#allocation2 + $0x68] sm:$0xff]
      %v52 = vld [vmem:[#allocation2 + $0x70] sm:$0xff]
      %v53 = vld [vmem:[#allocation2 + $0x78] sm:$0xff]
      %v54 = vld [vmem:[%s0] sm:$0xff]
      %v55 = vld [vmem:[%s0 + $0x8] sm:$0xff]
      %v56 = vld [vmem:[%s0 + $0x10] sm:$0xff]
      %v57 = vld [vmem:[%s0 + $0x18] sm:$0xff]
      %v58 = vld [vmem:[%s0 + $0x20] sm:$0xff]
      %v59 = vld [vmem:[%s0 + $0x28] sm:$0xff]
      %v60 = vld [vmem:[%s0 + $0x30] sm:$0xff]
      %v61 = vld [vmem:[%s0 + $0x38] sm:$0xff]
      %v62 = vld [vmem:[%s0 + $0x40] sm:$0xff]
      %v63 = vld [vmem:[%s0 + $0x48] sm:$0xff]
      %v64 = vld [vmem:[%s0 + $0x50] sm:$0xff]
      %v65 = vld [vmem:[%s0 + $0x58] sm:$0xff]
      %v66 = vld [vmem:[%s0 + $0x60] sm:$0xff]
      %v67 = vld [vmem:[%s0 + $0x68] sm:$0xff]
      %v68 = vld [vmem:[%s0 + $0x70] sm:$0xff]
      %v69 = vld [vmem:[%s0 + $0x78] sm:$0xff]
      %v70 = vld [vmem:[%s1] sm:$0xff]
      %v71 = vld [vmem:[%s1 + $0x8] sm:$0xff]
      %vm72 = vcmask 64512
      %v74 = vsel %vm72, %v54, 0
      %v77 = vsel %vm72, %v55, 0
      %v80 = vsel %vm72, %v56, 0
      %v83 = vsel %vm72, %v57, 0
      %v86 = vsel %vm72, %v58, 0
      %v89 = vsel %vm72, %v59, 0
      %v92 = vsel %vm72, %v60, 0
      %v95 = vsel %vm72, %v61, 0
      %v98 = vsel %vm72, %v62, 0
      %v101 = vsel %vm72, %v63, 0
      %v104 = vsel %vm72, %v64, 0
      %v107 = vsel %vm72, %v65, 0
      %v110 = vsel %vm72, %v66, 0
      %v113 = vsel %vm72, %v67, 0
      %v116 = vsel %vm72, %v68, 0
      %v119 = vsel %vm72, %v69, 0
      %121 = vmatprep.subr.mxu0 %v71
      %122 = vmatpush1.msra.mxu0 %v70
      %123 = vmatprep.subr.mxu0 0.0
      %124 = vmatpush1.msra.mxu0 0.0
      %125 = vmatprep.subr.mxu0 0.0
      %126 = vmatpush1.msra.mxu0 0.0
      %127 = vmatprep.subr.mxu0 0.0
      %128 = vmatpush1.msra.mxu0 0.0
      %129 = vmatprep.subr.mxu0 0.0
      %130 = vmatpush1.msra.mxu0 0.0
      %131 = vmatprep.subr.mxu0 0.0
      %132 = vmatpush1.msra.mxu0 0.0
      %133 = vmatprep.subr.mxu0 0.0
      %134 = vmatpush1.msra.mxu0 0.0
      %135 = vmatprep.subr.mxu0 0.0
      %136 = vmatpush1.msra.mxu0 0.0
      %137 = vmatprep.subr.mxu0 0.0
      %138 = vmatpush1.msra.mxu0 0.0
      %139 = vmatprep.subr.mxu0 0.0
      %140 = vmatpush1.msra.mxu0 0.0
      %141 = vmatprep.subr.mxu0 0.0
      %142 = vmatpush1.msra.mxu0 0.0
      %143 = vmatprep.subr.mxu0 0.0
      %144 = vmatpush1.msra.mxu0 0.0
      %145 = vmatprep.subr.mxu0 0.0
      %146 = vmatpush1.msra.mxu0 0.0
      %147 = vmatprep.subr.mxu0 0.0
      %148 = vmatpush1.msra.mxu0 0.0
      %149 = vmatprep.subr.mxu0 0.0
      %150 = vmatpush1.msra.mxu0 0.0
      %151 = vmatprep.subr.mxu0 0.0
      %152 = vmatpush1.msra.mxu0 0.0
      %153 = vmatprep.subr.mxu0 0.0
      %154 = vmatpush1.msra.mxu0 0.0
      %155 = vmatprep.subr.mxu0 0.0
      %156 = vmatpush1.msra.mxu0 0.0
      %157 = vmatprep.subr.mxu0 0.0
      %158 = vmatpush1.msra.mxu0 0.0
      %159 = vmatprep.subr.mxu0 0.0
      %160 = vmatpush1.msra.mxu0 0.0
      %161 = vmatprep.subr.mxu0 0.0
      %162 = vmatpush1.msra.mxu0 0.0
      %163 = vmatprep.subr.mxu0 0.0
      %164 = vmatpush1.msra.mxu0 0.0
      %165 = vmatprep.subr.mxu0 0.0
      %166 = vmatpush1.msra.mxu0 0.0
      %167 = vmatprep.subr.mxu0 0.0
      %168 = vmatpush1.msra.mxu0 0.0
      %169 = vmatprep.subr.mxu0 0.0
      %170 = vmatpush1.msra.mxu0 0.0
      %171 = vmatprep.subr.mxu0 0.0
      %172 = vmatpush1.msra.mxu0 0.0
      %173 = vmatprep.subr.mxu0 0.0
      %174 = vmatpush1.msra.mxu0 0.0
      %175 = vmatprep.subr.mxu0 0.0
      %176 = vmatpush1.msra.mxu0 0.0
      %177 = vmatprep.subr.mxu0 0.0
      %178 = vmatpush1.msra.mxu0 0.0
      %179 = vmatprep.subr.mxu0 0.0
      %180 = vmatpush1.msra.mxu0 0.0
      %181 = vmatprep.subr.mxu0 0.0
      %182 = vmatpush1.msra.mxu0 0.0
      %183 = vmatprep.subr.mxu0 0.0
      %184 = vmatpush1.msra.mxu0 0.0
      %185 = vmatprep.mubr.f32.mxu0 0.0
      %186 = vmatmul.mubr.f32.gmra.mrb[0].mxu0 %v74
      %v187 = vpop.f32.mrb[0].mxu0
      %v188 = vadd.f32 0.0, %v187
      %v189 = vpop.f32.mrb[0].mxu0
      %v190 = vadd.f32 0.0, %v189
      %191 = vmatprep.mubr.f32.mxu0 0.0
      %192 = vmatmul.mubr.f32.gmra.mrb[0].mxu0 %v77
      %v193 = vpop.f32.mrb[0].mxu0
      %v194 = vadd.f32 0.0, %v193
      %v195 = vpop.f32.mrb[0].mxu0
      %v196 = vadd.f32 0.0, %v195
      %197 = vmatprep.mubr.f32.mxu0 0.0
      %198 = vmatmul.mubr.f32.gmra.mrb[0].mxu0 %v80
      %v199 = vpop.f32.mrb[0].mxu0
      %v200 = vadd.f32 0.0, %v199
      %v201 = vpop.f32.mrb[0].mxu0
      %v202 = vadd.f32 0.0, %v201
      %203 = vmatprep.mubr.f32.mxu0 0.0
      %204 = vmatmul.mubr.f32.gmra.mrb[0].mxu0 %v83
      %v205 = vpop.f32.mrb[0].mxu0
      %v206 = vadd.f32 0.0, %v205
      %v207 = vpop.f32.mrb[0].mxu0
      %v208 = vadd.f32 0.0, %v207
      %209 = vmatprep.mubr.f32.mxu0 0.0
      %210 = vmatmul.mubr.f32.gmra.mrb[0].mxu0 %v86
      %v211 = vpop.f32.mrb[0].mxu0
      %v212 = vadd.f32 0.0, %v211
      %v213 = vpop.f32.mrb[0].mxu0
      %v214 = vadd.f32 0.0, %v213
      %215 = vmatprep.mubr.f32.mxu0 0.0
      %216 = vmatmul.mubr.f32.gmra.mrb[0].mxu0 %v89
      %v217 = vpop.f32.mrb[0].mxu0
      %v218 = vadd.f32 0.0, %v217
      %v219 = vpop.f32.mrb[0].mxu0
      %v220 = vadd.f32 0.0, %v219
      %221 = vmatprep.mubr.f32.mxu0 0.0
      %222 = vmatmul.mubr.f32.gmra.mrb[0].mxu0 %v92
      %v223 = vpop.f32.mrb[0].mxu0
      %v224 = vadd.f32 0.0, %v223
      %v225 = vpop.f32.mrb[0].mxu0
      %v226 = vadd.f32 0.0, %v225
      %227 = vmatprep.mubr.f32.mxu0 0.0
      %228 = vmatmul.mubr.f32.gmra.mrb[0].mxu0 %v95
      %v229 = vpop.f32.mrb[0].mxu0
      %v230 = vadd.f32 0.0, %v229
      %v231 = vpop.f32.mrb[0].mxu0
      %v232 = vadd.f32 0.0, %v231
      %233 = vmatprep.mubr.f32.mxu0 0.0
      %234 = vmatmul.mubr.f32.gmra.mrb[0].mxu0 %v98
      %v235 = vpop.f32.mrb[0].mxu0
      %v236 = vadd.f32 0.0, %v235
      %v237 = vpop.f32.mrb[0].mxu0
      %v238 = vadd.f32 0.0, %v237
      %239 = vmatprep.mubr.f32.mxu0 0.0
      %240 = vmatmul.mubr.f32.gmra.mrb[0].mxu0 %v101
      %v241 = vpop.f32.mrb[0].mxu0
      %v242 = vadd.f32 0.0, %v241
      %v243 = vpop.f32.mrb[0].mxu0
      %v244 = vadd.f32 0.0, %v243
      %245 = vmatprep.mubr.f32.mxu0 0.0
      %246 = vmatmul.mubr.f32.gmra.mrb[0].mxu0 %v104
      %v247 = vpop.f32.mrb[0].mxu0
      %v248 = vadd.f32 0.0, %v247
      %v249 = vpop.f32.mrb[0].mxu0
      %v250 = vadd.f32 0.0, %v249
      %251 = vmatprep.mubr.f32.mxu0 0.0
      %252 = vmatmul.mubr.f32.gmra.mrb[0].mxu0 %v107
      %v253 = vpop.f32.mrb[0].mxu0
      %v254 = vadd.f32 0.0, %v253
      %v255 = vpop.f32.mrb[0].mxu0
      %v256 = vadd.f32 0.0, %v255
      %257 = vmatprep.mubr.f32.mxu0 0.0
      %258 = vmatmul.mubr.f32.gmra.mrb[0].mxu0 %v110
      %v259 = vpop.f32.mrb[0].mxu0
      %v260 = vadd.f32 0.0, %v259
      %v261 = vpop.f32.mrb[0].mxu0
      %v262 = vadd.f32 0.0, %v261
      %263 = vmatprep.mubr.f32.mxu0 0.0
      %264 = vmatmul.mubr.f32.gmra.mrb[0].mxu0 %v113
      %v265 = vpop.f32.mrb[0].mxu0
      %v266 = vadd.f32 0.0, %v265
      %v267 = vpop.f32.mrb[0].mxu0
      %v268 = vadd.f32 0.0, %v267
      %269 = vmatprep.mubr.f32.mxu0 0.0
      %270 = vmatmul.mubr.f32.gmra.mrb[0].mxu0 %v116
      %v271 = vpop.f32.mrb[0].mxu0
      %v272 = vadd.f32 0.0, %v271
      %v273 = vpop.f32.mrb[0].mxu0
      %v274 = vadd.f32 0.0, %v273
      %275 = vmatprep.mubr.f32.mxu0 0.0
      %276 = vmatmul.mubr.f32.gmra.mrb[0].mxu0 %v119
      %v277 = vpop.f32.mrb[0].mxu0
      %v278 = vadd.f32 0.0, %v277
      %v279 = vpop.f32.mrb[0].mxu0
      %v280 = vadd.f32 0.0, %v279
      %281 = vdwg.mxu0
      %v282 = vmul.f32 %v188, 4.0
      %v283 = vmul.f32 %v194, 4.0
      %v284 = vmul.f32 %v200, 4.0
      %v285 = vmul.f32 %v206, 4.0
      %v286 = vmul.f32 %v212, 4.0
      %v287 = vmul.f32 %v218, 4.0
      %v288 = vmul.f32 %v224, 4.0
      %v289 = vmul.f32 %v230, 4.0
      %v290 = vmul.f32 %v236, 4.0
      %v291 = vmul.f32 %v242, 4.0
      %v292 = vmul.f32 %v248, 4.0
      %v293 = vmul.f32 %v254, 4.0
      %v294 = vmul.f32 %v260, 4.0
      %v295 = vmul.f32 %v266, 4.0
      %v296 = vmul.f32 %v272, 4.0
      %v297 = vmul.f32 %v278, 4.0
      %v298 = vadd.f32 %v282, 1.0
      %v299 = vadd.f32 %v283, 1.0
      %v300 = vadd.f32 %v284, 1.0
      %v301 = vadd.f32 %v285, 1.0
      %v302 = vadd.f32 %v286, 1.0
      %v303 = vadd.f32 %v287, 1.0
      %v304 = vadd.f32 %v288, 1.0
      %v305 = vadd.f32 %v289, 1.0
      %v306 = vadd.f32 %v290, 1.0
      %v307 = vadd.f32 %v291, 1.0
      %v308 = vadd.f32 %v292, 1.0
      %v309 = vadd.f32 %v293, 1.0
      %v310 = vadd.f32 %v294, 1.0
      %v311 = vadd.f32 %v295, 1.0
      %v312 = vadd.f32 %v296, 1.0
      %v313 = vadd.f32 %v297, 1.0
      %v314 = vrcp.pop %v298
      %v315 = vrcp.pop %v299
      %v316 = vrcp.pop %v300
      %v317 = vrcp.pop %v301
      %v318 = vrcp.pop %v302
      %v319 = vrcp.pop %v303
      %v320 = vrcp.pop %v304
      %v321 = vrcp.pop %v305
      %v322 = vrcp.pop %v306
      %v323 = vrcp.pop %v307
      %v324 = vrcp.pop %v308
      %v325 = vrcp.pop %v309
      %v326 = vrcp.pop %v310
      %v327 = vrcp.pop %v311
      %v328 = vrcp.pop %v312
      %v329 = vrcp.pop %v313
      %v330 = vmul.f32 %v298, %v314
      %v331 = vmul.f32 %v299, %v315
      %v332 = vmul.f32 %v300, %v316
      %v333 = vmul.f32 %v301, %v317
      %v334 = vmul.f32 %v302, %v318
      %v335 = vmul.f32 %v303, %v319
      %v336 = vmul.f32 %v304, %v320
      %v337 = vmul.f32 %v305, %v321
      %v338 = vmul.f32 %v306, %v322
      %v339 = vmul.f32 %v307, %v323
      %v340 = vmul.f32 %v308, %v324
      %v341 = vmul.f32 %v309, %v325
      %v342 = vmul.f32 %v310, %v326
      %v343 = vmul.f32 %v311, %v327
      %v344 = vmul.f32 %v312, %v328
      %v345 = vmul.f32 %v313, %v329
      %v346 = vsub.f32 2.0, %v330
      %v347 = vsub.f32 2.0, %v331
      %v348 = vsub.f32 2.0, %v332
      %v349 = vsub.f32 2.0, %v333
      %v350 = vsub.f32 2.0, %v334
      %v351 = vsub.f32 2.0, %v335
      %v352 = vsub.f32 2.0, %v336
      %v353 = vsub.f32 2.0, %v337
      %v354 = vsub.f32 2.0, %v338
      %v355 = vsub.f32 2.0, %v339
      %v356 = vsub.f32 2.0, %v340
      %v357 = vsub.f32 2.0, %v341
      %v358 = vsub.f32 2.0, %v342
      %v359 = vsub.f32 2.0, %v343
      %v360 = vsub.f32 2.0, %v344
      %v361 = vsub.f32 2.0, %v345
      %v362 = vmul.f32 %v314, %v346
      %v363 = vmul.f32 %v315, %v347
      %v364 = vmul.f32 %v316, %v348
      %v365 = vmul.f32 %v317, %v349
      %v366 = vmul.f32 %v318, %v350
      %v367 = vmul.f32 %v319, %v351
      %v368 = vmul.f32 %v320, %v352
      %v369 = vmul.f32 %v321, %v353
      %v370 = vmul.f32 %v322, %v354
      %v371 = vmul.f32 %v323, %v355
      %v372 = vmul.f32 %v324, %v356
      %v373 = vmul.f32 %v325, %v357
      %v374 = vmul.f32 %v326, %v358
      %v375 = vmul.f32 %v327, %v359
      %v376 = vmul.f32 %v328, %v360
      %v377 = vmul.f32 %v329, %v361
      %v378 = vmul.f32 %v362, %v362
      %v379 = vmul.f32 %v363, %v363
      %v380 = vmul.f32 %v364, %v364
      %v381 = vmul.f32 %v365, %v365
      %v382 = vmul.f32 %v366, %v366
      %v383 = vmul.f32 %v367, %v367
      %v384 = vmul.f32 %v368, %v368
      %v385 = vmul.f32 %v369, %v369
      %v386 = vmul.f32 %v370, %v370
      %v387 = vmul.f32 %v371, %v371
      %v388 = vmul.f32 %v372, %v372
      %v389 = vmul.f32 %v373, %v373
      %v390 = vmul.f32 %v374, %v374
      %v391 = vmul.f32 %v375, %v375
      %v392 = vmul.f32 %v376, %v376
      %v393 = vmul.f32 %v377, %v377
      %v394 = vmul.f32 %v378, %v190
      %v395 = vmul.f32 %v379, %v196
      %v396 = vmul.f32 %v380, %v202
      %v397 = vmul.f32 %v381, %v208
      %v398 = vmul.f32 %v382, %v214
      %v399 = vmul.f32 %v383, %v220
      %v400 = vmul.f32 %v384, %v226
      %v401 = vmul.f32 %v385, %v232
      %v402 = vmul.f32 %v386, %v238
      %v403 = vmul.f32 %v387, %v244
      %v404 = vmul.f32 %v388, %v250
      %v405 = vmul.f32 %v389, %v256
      %v406 = vmul.f32 %v390, %v262
      %v407 = vmul.f32 %v391, %v268
      %v408 = vmul.f32 %v392, %v274
      %v409 = vmul.f32 %v393, %v280
      %v410 = vstv %s37
      %v411 = vmul.f32 %v410, %v394
      %v412 = vmul.f32 %v410, %v395
      %v413 = vmul.f32 %v410, %v396
      %v414 = vmul.f32 %v410, %v397
      %v415 = vmul.f32 %v410, %v398
      %v416 = vmul.f32 %v410, %v399
      %v417 = vmul.f32 %v410, %v400
      %v418 = vmul.f32 %v410, %v401
      %v419 = vmul.f32 %v410, %v402
      %v420 = vmul.f32 %v410, %v403
      %v421 = vmul.f32 %v410, %v404
      %v422 = vmul.f32 %v410, %v405
      %v423 = vmul.f32 %v410, %v406
      %v424 = vmul.f32 %v410, %v407
      %v425 = vmul.f32 %v410, %v408
      %v426 = vmul.f32 %v410, %v409
      %v427 = vadd.f32 %v38, %v411
      %v428 = vadd.f32 %v39, %v412
      %v429 = vadd.f32 %v40, %v413
      %v430 = vadd.f32 %v41, %v414
      %v431 = vadd.f32 %v42, %v415
      %v432 = vadd.f32 %v43, %v416
      %v433 = vadd.f32 %v44, %v417
      %v434 = vadd.f32 %v45, %v418
      %v435 = vadd.f32 %v46, %v419
      %v436 = vadd.f32 %v47, %v420
      %v437 = vadd.f32 %v48, %v421
      %v438 = vadd.f32 %v49, %v422
      %v439 = vadd.f32 %v50, %v423
      %v440 = vadd.f32 %v51, %v424
      %v441 = vadd.f32 %v52, %v425
      %v442 = vadd.f32 %v53, %v426
      %443 = vst [vmem:[#allocation2] sm:$0xff] %v427
      %444 = vst [vmem:[#allocation2 + $0x8] sm:$0xff] %v428
      %445 = vst [vmem:[#allocation2 + $0x10] sm:$0xff] %v429
      %446 = vst [vmem:[#allocation2 + $0x18] sm:$0xff] %v430
      %447 = vst [vmem:[#allocation2 + $0x20] sm:$0xff] %v431
      %448 = vst [vmem:[#allocation2 + $0x28] sm:$0xff] %v432
      %449 = vst [vmem:[#allocation2 + $0x30] sm:$0xff] %v433
      %450 = vst [vmem:[#allocation2 + $0x38] sm:$0xff] %v434
      %451 = vst [vmem:[#allocation2 + $0x40] sm:$0xff] %v435
      %452 = vst [vmem:[#allocation2 + $0x48] sm:$0xff] %v436
      %453 = vst [vmem:[#allocation2 + $0x50] sm:$0xff] %v437
      %454 = vst [vmem:[#allocation2 + $0x58] sm:$0xff] %v438
      %455 = vst [vmem:[#allocation2 + $0x60] sm:$0xff] %v439
      %456 = vst [vmem:[#allocation2 + $0x68] sm:$0xff] %v440
      %457 = vst [vmem:[#allocation2 + $0x70] sm:$0xff] %v441
      %458 = vst [vmem:[#allocation2 + $0x78] sm:$0xff] %v442
    $region17: #{tpu_custom_call.1} parent=1 // pred_fallthru
      _
    // Predicated region
    $region18: #{tpu_custom_call.1} parent=1 // pred_check
      _
    $region19: #{tpu_custom_call.1} parent=1 // pred_check_branch
      %460 = sbr.rel (0) target = $region21
    $region20: #{tpu_custom_call.1} parent=1 // pred_region
      %s462 = ssub.s32 2048, 2048
      %463 = vsyncadd [#allocation3], %s462
      %s464 = sshll.u32 [#allocation2], 4
      %s465 = int_to_ptr.vmem [resolvable:$true] %s464
      %470 = dma.vmem_to_hbm [thread:$0]  %s465, 2048, %s2, [#allocation3], 128, 128, 8
    $region21: #{tpu_custom_call.1} parent=1 // pred_fallthru
      _
    // Predicated region
    $region22: #{tpu_custom_call.1} parent=1 // pred_check
      _
    $region23: #{tpu_custom_call.1} parent=1 // pred_check_branch
      %472 = sbr.rel (0) target = $region25
    $region24: #{tpu_custom_call.1} parent=1 // pred_region
      %473 = dma.done [#allocation3], 2048
    $region25: #{tpu_custom_call.1} parent=1 // pred_fallthru
      _
    %474 = vsyncpa [#allocation3], 1

</llo_original>
